<compile_context>
chip_gen: v7x
topology: tpu7x:2x2x1
jax: 0.10.0
libtpu: 0.0.40
codegen_flags: <defaults>
</compile_context>

<pallas_src>
import math

import jax
import jax.numpy as jnp
import numpy as np
from jax.experimental import pallas as pl
from jax.experimental.pallas import tpu as pltpu

# Problem sizes (match the module: embed_dim=6, num_heads=2).
L, N, E, H = 8, 2, 6, 2
Dh = E // H
T = L * N                      # 16 tokens, l-major: token t -> (l = t // N, n = t % N)
LEAKY = 0.2
EPS = 1e-5

# Bias/LN slab row indices.
_BQ0, _BQ1, _BK, _BVO0, _BVO1, _BO, _BL1, _BL2, _LN1W, _LN1B, _LN2W, _LN2B = range(12)
# Weight slab block indices.
_WQ0, _WQ1, _WK, _WVO0, _WVO1, _WL1, _WL2 = range(7)


def _leaky(x):
    return jnp.where(x >= 0, x, LEAKY * x)


def _layernorm(x, w, b):
    # var = E[x^2] - mu^2: the two lane reductions are independent (overlap in the XLU).
    mu = jnp.mean(x, axis=-1, keepdims=True)
    var = jnp.mean(x * x, axis=-1, keepdims=True) - mu * mu
    return (x - mu) * jax.lax.rsqrt(var + EPS) * w + b


def attention_encode_kernel(x_ref, w_ref, b_ref, o_ref):
    f32 = jnp.float32
    x = x_ref[...]                      # (T, E)
    b = b_ref[...]                      # (12, E)

    # Cross-batch additive mask for the stacked (2T, T) scores, built from iota (no
    # captured array constants). Tokens are l-major, so token t belongs to batch t % N;
    # stacked-score rows wrap mod T (T is a multiple of N and N is a power of two here,
    # so the XOR low-bit test is exact).
    r = jax.lax.broadcasted_iota(jnp.int32, (2 * T, T), 0)
    c = jax.lax.broadcasted_iota(jnp.int32, (2 * T, T), 1)
    mask_bias = jnp.where(((r ^ c) & (N - 1)) == 0, 0.0, -1e30).astype(f32)

    # Per-head projections (head masks, 1/sqrt(Dh) scale and Wo folded into the slabs
    # host-side). All five matmuls are independent -> they pipeline in the MXU.
    q0 = jnp.dot(x, w_ref[_WQ0], preferred_element_type=f32) + b[_BQ0:_BQ0 + 1]
    q1 = jnp.dot(x, w_ref[_WQ1], preferred_element_type=f32) + b[_BQ1:_BQ1 + 1]
    k = jnp.dot(x, w_ref[_WK], preferred_element_type=f32) + b[_BK:_BK + 1]
    vo0 = jnp.dot(x, w_ref[_WVO0], preferred_element_type=f32) + b[_BVO0:_BVO0 + 1]
    vo1 = jnp.dot(x, w_ref[_WVO1], preferred_element_type=f32) + b[_BVO1:_BVO1 + 1]

    # Both heads' scores in one (2T, T) matmul (heads stacked along sublanes), then a
    # single uniform row softmax. q0/q1 are zero outside their own head's lanes, so the
    # full-width contraction against the full k gives exactly the per-head scores.
    q2 = jnp.concatenate([q0, q1], axis=0)                         # (2T, E)
    s = jax.lax.dot_general(q2, k, (((1,), (1,)), ((), ())),
                            preferred_element_type=f32)            # (2T, T) = q2 @ k.T
    s = s + mask_bias
    s = s - jnp.max(s, axis=-1, keepdims=True)
    p = jnp.exp(s)
    p = p * pl.reciprocal(jnp.sum(p, axis=-1, keepdims=True), approx=True)

    # P @ (V @ Wo) per head: two independent matmuls on sublane-aligned slices of p.
    att = (jnp.dot(p[0:T], vo0, preferred_element_type=f32)
           + jnp.dot(p[T:2 * T], vo1, preferred_element_type=f32)
           + b[_BO:_BO + 1])

    # TODO(synk): F.dropout(p=0.5, training=True) is stochastic; treated as identity.
    add1 = _leaky(att + x)
    norm1 = _layernorm(add1, b[_LN1W:_LN1W + 1], b[_LN1B:_LN1B + 1])

    y = _leaky(jnp.dot(norm1, w_ref[_WL1], preferred_element_type=f32) + b[_BL1:_BL1 + 1])
    y = _leaky(jnp.dot(y, w_ref[_WL2], preferred_element_type=f32) + b[_BL2:_BL2 + 1])

    add2 = _leaky(y + norm1)
    o_ref[...] = _layernorm(add2, b[_LN2W:_LN2W + 1], b[_LN2B:_LN2B + 1])


@jax.jit
def attention_module_encode(enc_output, w_slab, b_slab):
    """enc_output: (L, N, E) f32; w_slab: (7, E, E) f32; b_slab: (12, E) f32."""
    x2d = enc_output.reshape(T, E)               # free contiguous view (l-major tokens)
    vmem = pl.BlockSpec(memory_space=pltpu.MemorySpace.VMEM)
    out = pl.pallas_call(
        attention_encode_kernel,
        out_shape=jax.ShapeDtypeStruct((T, E), jnp.float32),
        in_specs=[vmem, vmem, vmem],
        out_specs=vmem,
    )(x2d, w_slab, b_slab)
    return out.reshape(L, N, E)                  # free view back to (L, N, E)


def make_raw_params(key):
    """Raw parameters in PyTorch layout (Linear weights are (out, in))."""
    ks = jax.random.split(key, 8)
    return dict(
        in_proj_w=jax.random.normal(ks[0], (3 * E, E), jnp.float32) * 0.1,
        in_proj_b=jax.random.normal(ks[1], (3 * E,), jnp.float32) * 0.1,
        out_proj_w=jax.random.normal(ks[2], (E, E), jnp.float32) * 0.1,
        out_proj_b=jax.random.normal(ks[3], (E,), jnp.float32) * 0.1,
        lin1_w=jax.random.normal(ks[4], (E, E), jnp.float32) * 0.1,
        lin1_b=jax.random.normal(ks[5], (E,), jnp.float32) * 0.1,
        lin2_w=jax.random.normal(ks[6], (E, E), jnp.float32) * 0.1,
        lin2_b=jax.random.normal(ks[7], (E,), jnp.float32) * 0.1,
        ln1_w=jnp.ones((E,), jnp.float32), ln1_b=jnp.zeros((E,), jnp.float32),
        ln2_w=jnp.ones((E,), jnp.float32), ln2_b=jnp.zeros((E,), jnp.float32),
    )


def pack_params(raw):
    """Pack the 16 parameter arrays into two tile-aligned kernel slabs.

    Weight blocks are stored (in, out) (transposed from torch's (out, in)); head masks,
    the 1/sqrt(Dh) query scale and the attention out-projection Wo are folded in here so
    the kernel needs no runtime masking and one fewer serial matmul.
    """
    scale = 1.0 / math.sqrt(Dh)
    hm = np.zeros((H, E), np.float32)
    for h in range(H):
        hm[h, h * Dh:(h + 1) * Dh] = 1.0

    ipw = np.asarray(raw["in_proj_w"], np.float32)
    ipb = np.asarray(raw["in_proj_b"], np.float32)
    wq_t, wk_t, wv_t = ipw[0:E].T, ipw[E:2 * E].T, ipw[2 * E:3 * E].T
    bq, bk, bv = ipb[0:E], ipb[E:2 * E], ipb[2 * E:3 * E]
    wo_t = np.asarray(raw["out_proj_w"], np.float32).T
    bo = np.asarray(raw["out_proj_b"], np.float32)

    w_blocks = np.stack([
        wq_t * hm[0] * scale,                       # _WQ0 : head-0 query proj (scaled)
        wq_t * hm[1] * scale,                       # _WQ1 : head-1 query proj (scaled)
        wk_t,                                       # _WK  : full key proj
        (wv_t * hm[0]) @ wo_t,                      # _WVO0: head-0 value proj folded w/ Wo
        (wv_t * hm[1]) @ wo_t,                      # _WVO1: head-1 value proj folded w/ Wo
        np.asarray(raw["lin1_w"], np.float32).T,    # _WL1
        np.asarray(raw["lin2_w"], np.float32).T,    # _WL2
    ]).astype(np.float32)                           # (7, E, E)

    b_rows = np.stack([
        bq * hm[0] * scale,                         # _BQ0
        bq * hm[1] * scale,                         # _BQ1
        bk,                                         # _BK
        (bv * hm[0]) @ wo_t,                        # _BVO0
        (bv * hm[1]) @ wo_t,                        # _BVO1
        bo,                                         # _BO
        np.asarray(raw["lin1_b"], np.float32),      # _BL1
        np.asarray(raw["lin2_b"], np.float32),      # _BL2
        np.asarray(raw["ln1_w"], np.float32),       # _LN1W
        np.asarray(raw["ln1_b"], np.float32),       # _LN1B
        np.asarray(raw["ln2_w"], np.float32),       # _LN2W
        np.asarray(raw["ln2_b"], np.float32),       # _LN2B
    ]).astype(np.float32)                           # (12, E)

    return jnp.asarray(w_blocks), jnp.asarray(b_rows)


def reference(enc_output, raw):
    """Pure-JAX reference mirroring the PyTorch forward (dropout as identity)."""
    x = enc_output                                   # (L, N, E)
    scale = 1.0 / math.sqrt(Dh)
    Wq, Wk, Wv = raw["in_proj_w"][0:E], raw["in_proj_w"][E:2 * E], raw["in_proj_w"][2 * E:3 * E]
    bq, bk, bv = raw["in_proj_b"][0:E], raw["in_proj_b"][E:2 * E], raw["in_proj_b"][2 * E:3 * E]
    q = (jnp.einsum("lne,fe->lnf", x, Wq) + bq) * scale
    k = jnp.einsum("lne,fe->lnf", x, Wk) + bk
    v = jnp.einsum("lne,fe->lnf", x, Wv) + bv
    qh = q.reshape(L, N, H, Dh)
    kh = k.reshape(L, N, H, Dh)
    vh = v.reshape(L, N, H, Dh)
    s = jnp.einsum("qnhd,knhd->nhqk", qh, kh)
    p = jax.nn.softmax(s, axis=-1)
    att = jnp.einsum("nhqk,knhd->qnhd", p, vh).reshape(L, N, E)
    att = jnp.einsum("lne,fe->lnf", att, raw["out_proj_w"]) + raw["out_proj_b"]

    def ln(t, w, b):
        mu = jnp.mean(t, axis=-1, keepdims=True)
        var = jnp.mean((t - mu) ** 2, axis=-1, keepdims=True)
        return (t - mu) * jax.lax.rsqrt(var + EPS) * w + b

    def lk(t):
        return jnp.where(t >= 0, t, LEAKY * t)

    add1 = lk(att + x)
    norm1 = ln(add1, raw["ln1_w"], raw["ln1_b"])
    y = lk(jnp.einsum("lne,fe->lnf", norm1, raw["lin1_w"]) + raw["lin1_b"])
    y = lk(jnp.einsum("lne,fe->lnf", y, raw["lin2_w"]) + raw["lin2_b"])
    add2 = lk(y + norm1)
    return ln(add2, raw["ln2_w"], raw["ln2_b"])


if __name__ == "__main__":
    key = jax.random.PRNGKey(0)
    k_in, k_par = jax.random.split(key)
    enc_output = jax.random.normal(k_in, (L, N, E), jnp.float32)
    raw = make_raw_params(k_par)
    w_slab, b_slab = pack_params(raw)

    out = attention_module_encode(enc_output, w_slab, b_slab)
    out = jax.block_until_ready(out)

    ref = reference(enc_output, raw)
    # Tolerance accommodates the approximate EUP reciprocal in the softmax normalization.
    np.testing.assert_allclose(np.asarray(out), np.asarray(ref), rtol=2e-3, atol=2e-3)

    print("KERNEL_OK")
</pallas_src>

<mosaic_0001>
module attributes {stable_mosaic.version = 11 : i64} {
  func.func @attention_encode_kernel(%arg0: memref<16x6xf32, #tpu.memory_space<vmem>>, %arg1: memref<7x6x6xf32, #tpu.memory_space<vmem>>, %arg2: memref<12x6xf32, #tpu.memory_space<vmem>>, %arg3: memref<16x6xf32, #tpu.memory_space<vmem>>) attributes {dimension_semantics = [], scalar_prefetch = 0 : i64, scratch_operands = 0 : i64, tpu.core_type = #tpu.core_type<tc>} {
    %c0 = arith.constant 0 : index
    %c0_0 = arith.constant 0 : index
    %0 = vector.load %arg0[%c0, %c0_0] : memref<16x6xf32, #tpu.memory_space<vmem>>, vector<16x6xf32>
    %c0_1 = arith.constant 0 : index
    %c0_2 = arith.constant 0 : index
    %1 = vector.load %arg2[%c0_1, %c0_2] : memref<12x6xf32, #tpu.memory_space<vmem>>, vector<12x6xf32>
    %2 = tpu.iota {dimensions = array<i32: 0>} : vector<32x16xi32>
    %3 = tpu.iota {dimensions = array<i32: 1>} : vector<32x16xi32>
    %4 = arith.xori %2, %3 : vector<32x16xi32>
    %c1_i32 = arith.constant 1 : i32
    %5 = vector.broadcast %c1_i32 : i32 to vector<32x16xi32>
    %6 = arith.andi %4, %5 : vector<32x16xi32>
    %c0_i32 = arith.constant 0 : i32
    %7 = vector.broadcast %c0_i32 : i32 to vector<32x16xi32>
    %8 = arith.cmpi eq, %6, %7 : vector<32x16xi32>
    %cst = arith.constant 0.000000e+00 : f32
    %cst_3 = arith.constant -1.000000e+30 : f32
    %9 = vector.broadcast %cst : f32 to vector<32x16xf32>
    %10 = vector.broadcast %cst_3 : f32 to vector<32x16xf32>
    %11 = arith.select %8, %9, %10 : vector<32x16xi1>, vector<32x16xf32>
    %c0_4 = arith.constant 0 : index
    %c0_5 = arith.constant 0 : index
    %c0_6 = arith.constant 0 : index
    %12 = vector.load %arg1[%c0_4, %c0_5, %c0_6] : memref<7x6x6xf32, #tpu.memory_space<vmem>>, vector<1x6x6xf32>
    %13 = vector.shape_cast %12 : vector<1x6x6xf32> to vector<6x6xf32>
    %cst_7 = arith.constant dense<0.000000e+00> : vector<16x6xf32>
    %14 = tpu.matmul %0, %13, %cst_7 {dimension_numbers = #tpu.dot_dimension_numbers<[1], [0], [0], [1], [0, 0, 1, 1], [], []>} : vector<16x6xf32>, vector<6x6xf32>, vector<16x6xf32> -> vector<16x6xf32>
    %15 = vector.extract_strided_slice %1 {offsets = [0, 0], sizes = [1, 6], strides = [1, 1]} : vector<12x6xf32> to vector<1x6xf32>
    %16 = vector.broadcast %15 : vector<1x6xf32> to vector<16x6xf32>
    %17 = arith.addf %14, %16 : vector<16x6xf32>
    %c1 = arith.constant 1 : index
    %c0_8 = arith.constant 0 : index
    %c0_9 = arith.constant 0 : index
    %18 = vector.load %arg1[%c1, %c0_8, %c0_9] : memref<7x6x6xf32, #tpu.memory_space<vmem>>, vector<1x6x6xf32>
    %19 = vector.shape_cast %18 : vector<1x6x6xf32> to vector<6x6xf32>
    %cst_10 = arith.constant dense<0.000000e+00> : vector<16x6xf32>
    %20 = tpu.matmul %0, %19, %cst_10 {dimension_numbers = #tpu.dot_dimension_numbers<[1], [0], [0], [1], [0, 0, 1, 1], [], []>} : vector<16x6xf32>, vector<6x6xf32>, vector<16x6xf32> -> vector<16x6xf32>
    %21 = vector.extract_strided_slice %1 {offsets = [1, 0], sizes = [1, 6], strides = [1, 1]} : vector<12x6xf32> to vector<1x6xf32>
    %22 = vector.broadcast %21 : vector<1x6xf32> to vector<16x6xf32>
    %23 = arith.addf %20, %22 : vector<16x6xf32>
    %c2 = arith.constant 2 : index
    %c0_11 = arith.constant 0 : index
    %c0_12 = arith.constant 0 : index
    %24 = vector.load %arg1[%c2, %c0_11, %c0_12] : memref<7x6x6xf32, #tpu.memory_space<vmem>>, vector<1x6x6xf32>
    %25 = vector.shape_cast %24 : vector<1x6x6xf32> to vector<6x6xf32>
    %cst_13 = arith.constant dense<0.000000e+00> : vector<16x6xf32>
    %26 = tpu.matmul %0, %25, %cst_13 {dimension_numbers = #tpu.dot_dimension_numbers<[1], [0], [0], [1], [0, 0, 1, 1], [], []>} : vector<16x6xf32>, vector<6x6xf32>, vector<16x6xf32> -> vector<16x6xf32>
    %27 = vector.extract_strided_slice %1 {offsets = [2, 0], sizes = [1, 6], strides = [1, 1]} : vector<12x6xf32> to vector<1x6xf32>
    %28 = vector.broadcast %27 : vector<1x6xf32> to vector<16x6xf32>
    %29 = arith.addf %26, %28 : vector<16x6xf32>
    %c3 = arith.constant 3 : index
    %c0_14 = arith.constant 0 : index
    %c0_15 = arith.constant 0 : index
    %30 = vector.load %arg1[%c3, %c0_14, %c0_15] : memref<7x6x6xf32, #tpu.memory_space<vmem>>, vector<1x6x6xf32>
    %31 = vector.shape_cast %30 : vector<1x6x6xf32> to vector<6x6xf32>
    %cst_16 = arith.constant dense<0.000000e+00> : vector<16x6xf32>
    %32 = tpu.matmul %0, %31, %cst_16 {dimension_numbers = #tpu.dot_dimension_numbers<[1], [0], [0], [1], [0, 0, 1, 1], [], []>} : vector<16x6xf32>, vector<6x6xf32>, vector<16x6xf32> -> vector<16x6xf32>
    %33 = vector.extract_strided_slice %1 {offsets = [3, 0], sizes = [1, 6], strides = [1, 1]} : vector<12x6xf32> to vector<1x6xf32>
    %34 = vector.broadcast %33 : vector<1x6xf32> to vector<16x6xf32>
    %35 = arith.addf %32, %34 : vector<16x6xf32>
    %c4 = arith.constant 4 : index
    %c0_17 = arith.constant 0 : index
    %c0_18 = arith.constant 0 : index
    %36 = vector.load %arg1[%c4, %c0_17, %c0_18] : memref<7x6x6xf32, #tpu.memory_space<vmem>>, vector<1x6x6xf32>
    %37 = vector.shape_cast %36 : vector<1x6x6xf32> to vector<6x6xf32>
    %cst_19 = arith.constant dense<0.000000e+00> : vector<16x6xf32>
    %38 = tpu.matmul %0, %37, %cst_19 {dimension_numbers = #tpu.dot_dimension_numbers<[1], [0], [0], [1], [0, 0, 1, 1], [], []>} : vector<16x6xf32>, vector<6x6xf32>, vector<16x6xf32> -> vector<16x6xf32>
    %39 = vector.extract_strided_slice %1 {offsets = [4, 0], sizes = [1, 6], strides = [1, 1]} : vector<12x6xf32> to vector<1x6xf32>
    %40 = vector.broadcast %39 : vector<1x6xf32> to vector<16x6xf32>
    %41 = arith.addf %38, %40 : vector<16x6xf32>
    %42 = tpu.concatenate %17, %23 in 0 : vector<16x6xf32>, vector<16x6xf32> -> vector<32x6xf32>
    %cst_20 = arith.constant dense<0.000000e+00> : vector<32x16xf32>
    %43 = tpu.matmul %42, %29, %cst_20 {dimension_numbers = #tpu.dot_dimension_numbers<[1], [1], [0], [0], [0, 0, 1, 0], [], []>} : vector<32x6xf32>, vector<16x6xf32>, vector<32x16xf32> -> vector<32x16xf32>
    %44 = arith.addf %43, %11 : vector<32x16xf32>
    %cst_21 = arith.constant dense<0xFF800000> : vector<32xf32>
    %45 = vector.multi_reduction <maximumf>, %44, %cst_21 [1] : vector<32x16xf32> to vector<32xf32>
    %46 = vector.shape_cast %45 : vector<32xf32> to vector<32x1xf32>
    %47 = vector.broadcast %46 : vector<32x1xf32> to vector<32x16xf32>
    %48 = arith.subf %44, %47 : vector<32x16xf32>
    %49 = math.exp %48 : vector<32x16xf32>
    %cst_22 = arith.constant dense<0.000000e+00> : vector<32xf32>
    %50 = vector.multi_reduction <add>, %49, %cst_22 [1] : vector<32x16xf32> to vector<32xf32>
    %51 = vector.shape_cast %50 : vector<32xf32> to vector<32x1xf32>
    %52 = tpu.reciprocal %51 {approx = true} : vector<32x1xf32> -> vector<32x1xf32>
    %53 = vector.broadcast %52 : vector<32x1xf32> to vector<32x16xf32>
    %54 = arith.mulf %49, %53 : vector<32x16xf32>
    %55 = vector.extract_strided_slice %54 {offsets = [0, 0], sizes = [16, 16], strides = [1, 1]} : vector<32x16xf32> to vector<16x16xf32>
    %cst_23 = arith.constant dense<0.000000e+00> : vector<16x6xf32>
    %56 = tpu.matmul %55, %35, %cst_23 {dimension_numbers = #tpu.dot_dimension_numbers<[1], [0], [0], [1], [0, 0, 1, 1], [], []>} : vector<16x16xf32>, vector<16x6xf32>, vector<16x6xf32> -> vector<16x6xf32>
    %57 = vector.extract_strided_slice %54 {offsets = [16, 0], sizes = [16, 16], strides = [1, 1]} : vector<32x16xf32> to vector<16x16xf32>
    %cst_24 = arith.constant dense<0.000000e+00> : vector<16x6xf32>
    %58 = tpu.matmul %57, %41, %cst_24 {dimension_numbers = #tpu.dot_dimension_numbers<[1], [0], [0], [1], [0, 0, 1, 1], [], []>} : vector<16x16xf32>, vector<16x6xf32>, vector<16x6xf32> -> vector<16x6xf32>
    %59 = arith.addf %56, %58 : vector<16x6xf32>
    %60 = vector.extract_strided_slice %1 {offsets = [5, 0], sizes = [1, 6], strides = [1, 1]} : vector<12x6xf32> to vector<1x6xf32>
    %61 = vector.broadcast %60 : vector<1x6xf32> to vector<16x6xf32>
    %62 = arith.addf %59, %61 : vector<16x6xf32>
    %63 = arith.addf %62, %0 : vector<16x6xf32>
    %cst_25 = arith.constant 0.000000e+00 : f32
    %64 = vector.broadcast %cst_25 : f32 to vector<16x6xf32>
    %65 = arith.cmpf oge, %63, %64 : vector<16x6xf32>
    %cst_26 = arith.constant 2.000000e-01 : f32
    %66 = vector.broadcast %cst_26 : f32 to vector<16x6xf32>
    %67 = arith.mulf %66, %63 : vector<16x6xf32>
    %68 = arith.select %65, %63, %67 : vector<16x6xi1>, vector<16x6xf32>
    %69 = vector.extract_strided_slice %1 {offsets = [8, 0], sizes = [1, 6], strides = [1, 1]} : vector<12x6xf32> to vector<1x6xf32>
    %70 = vector.extract_strided_slice %1 {offsets = [9, 0], sizes = [1, 6], strides = [1, 1]} : vector<12x6xf32> to vector<1x6xf32>
    %cst_27 = arith.constant dense<0.000000e+00> : vector<16xf32>
    %71 = vector.multi_reduction <add>, %68, %cst_27 [1] : vector<16x6xf32> to vector<16xf32>
    %72 = vector.shape_cast %71 : vector<16xf32> to vector<16x1xf32>
    %cst_28 = arith.constant 6.000000e+00 : f32
    %73 = vector.broadcast %cst_28 : f32 to vector<16x1xf32>
    %74 = arith.divf %72, %73 : vector<16x1xf32>
    %75 = arith.mulf %68, %68 : vector<16x6xf32>
    %cst_29 = arith.constant dense<0.000000e+00> : vector<16xf32>
    %76 = vector.multi_reduction <add>, %75, %cst_29 [1] : vector<16x6xf32> to vector<16xf32>
    %77 = vector.shape_cast %76 : vector<16xf32> to vector<16x1xf32>
    %cst_30 = arith.constant 6.000000e+00 : f32
    %78 = vector.broadcast %cst_30 : f32 to vector<16x1xf32>
    %79 = arith.divf %77, %78 : vector<16x1xf32>
    %80 = arith.mulf %74, %74 : vector<16x1xf32>
    %81 = arith.subf %79, %80 : vector<16x1xf32>
    %82 = vector.broadcast %74 : vector<16x1xf32> to vector<16x6xf32>
    %83 = arith.subf %68, %82 : vector<16x6xf32>
    %cst_31 = arith.constant 9.99999974E-6 : f32
    %84 = vector.broadcast %cst_31 : f32 to vector<16x1xf32>
    %85 = arith.addf %81, %84 : vector<16x1xf32>
    %86 = math.rsqrt %85 : vector<16x1xf32>
    %87 = vector.broadcast %86 : vector<16x1xf32> to vector<16x6xf32>
    %88 = arith.mulf %83, %87 : vector<16x6xf32>
    %89 = vector.broadcast %69 : vector<1x6xf32> to vector<16x6xf32>
    %90 = arith.mulf %88, %89 : vector<16x6xf32>
    %91 = vector.broadcast %70 : vector<1x6xf32> to vector<16x6xf32>
    %92 = arith.addf %90, %91 : vector<16x6xf32>
    %c5 = arith.constant 5 : index
    %c0_32 = arith.constant 0 : index
    %c0_33 = arith.constant 0 : index
    %93 = vector.load %arg1[%c5, %c0_32, %c0_33] : memref<7x6x6xf32, #tpu.memory_space<vmem>>, vector<1x6x6xf32>
    %94 = vector.shape_cast %93 : vector<1x6x6xf32> to vector<6x6xf32>
    %cst_34 = arith.constant dense<0.000000e+00> : vector<16x6xf32>
    %95 = tpu.matmul %92, %94, %cst_34 {dimension_numbers = #tpu.dot_dimension_numbers<[1], [0], [0], [1], [0, 0, 1, 1], [], []>} : vector<16x6xf32>, vector<6x6xf32>, vector<16x6xf32> -> vector<16x6xf32>
    %96 = vector.extract_strided_slice %1 {offsets = [6, 0], sizes = [1, 6], strides = [1, 1]} : vector<12x6xf32> to vector<1x6xf32>
    %97 = vector.broadcast %96 : vector<1x6xf32> to vector<16x6xf32>
    %98 = arith.addf %95, %97 : vector<16x6xf32>
    %cst_35 = arith.constant 0.000000e+00 : f32
    %99 = vector.broadcast %cst_35 : f32 to vector<16x6xf32>
    %100 = arith.cmpf oge, %98, %99 : vector<16x6xf32>
    %cst_36 = arith.constant 2.000000e-01 : f32
    %101 = vector.broadcast %cst_36 : f32 to vector<16x6xf32>
    %102 = arith.mulf %101, %98 : vector<16x6xf32>
    %103 = arith.select %100, %98, %102 : vector<16x6xi1>, vector<16x6xf32>
    %c6 = arith.constant 6 : index
    %c0_37 = arith.constant 0 : index
    %c0_38 = arith.constant 0 : index
    %104 = vector.load %arg1[%c6, %c0_37, %c0_38] : memref<7x6x6xf32, #tpu.memory_space<vmem>>, vector<1x6x6xf32>
    %105 = vector.shape_cast %104 : vector<1x6x6xf32> to vector<6x6xf32>
    %cst_39 = arith.constant dense<0.000000e+00> : vector<16x6xf32>
    %106 = tpu.matmul %103, %105, %cst_39 {dimension_numbers = #tpu.dot_dimension_numbers<[1], [0], [0], [1], [0, 0, 1, 1], [], []>} : vector<16x6xf32>, vector<6x6xf32>, vector<16x6xf32> -> vector<16x6xf32>
    %107 = vector.extract_strided_slice %1 {offsets = [7, 0], sizes = [1, 6], strides = [1, 1]} : vector<12x6xf32> to vector<1x6xf32>
    %108 = vector.broadcast %107 : vector<1x6xf32> to vector<16x6xf32>
    %109 = arith.addf %106, %108 : vector<16x6xf32>
    %cst_40 = arith.constant 0.000000e+00 : f32
    %110 = vector.broadcast %cst_40 : f32 to vector<16x6xf32>
    %111 = arith.cmpf oge, %109, %110 : vector<16x6xf32>
    %cst_41 = arith.constant 2.000000e-01 : f32
    %112 = vector.broadcast %cst_41 : f32 to vector<16x6xf32>
    %113 = arith.mulf %112, %109 : vector<16x6xf32>
    %114 = arith.select %111, %109, %113 : vector<16x6xi1>, vector<16x6xf32>
    %115 = arith.addf %114, %92 : vector<16x6xf32>
    %cst_42 = arith.constant 0.000000e+00 : f32
    %116 = vector.broadcast %cst_42 : f32 to vector<16x6xf32>
    %117 = arith.cmpf oge, %115, %116 : vector<16x6xf32>
    %cst_43 = arith.constant 2.000000e-01 : f32
    %118 = vector.broadcast %cst_43 : f32 to vector<16x6xf32>
    %119 = arith.mulf %118, %115 : vector<16x6xf32>
    %120 = arith.select %117, %115, %119 : vector<16x6xi1>, vector<16x6xf32>
    %121 = vector.extract_strided_slice %1 {offsets = [10, 0], sizes = [1, 6], strides = [1, 1]} : vector<12x6xf32> to vector<1x6xf32>
    %122 = vector.extract_strided_slice %1 {offsets = [11, 0], sizes = [1, 6], strides = [1, 1]} : vector<12x6xf32> to vector<1x6xf32>
    %cst_44 = arith.constant dense<0.000000e+00> : vector<16xf32>
    %123 = vector.multi_reduction <add>, %120, %cst_44 [1] : vector<16x6xf32> to vector<16xf32>
    %124 = vector.shape_cast %123 : vector<16xf32> to vector<16x1xf32>
    %cst_45 = arith.constant 6.000000e+00 : f32
    %125 = vector.broadcast %cst_45 : f32 to vector<16x1xf32>
    %126 = arith.divf %124, %125 : vector<16x1xf32>
    %127 = arith.mulf %120, %120 : vector<16x6xf32>
    %cst_46 = arith.constant dense<0.000000e+00> : vector<16xf32>
    %128 = vector.multi_reduction <add>, %127, %cst_46 [1] : vector<16x6xf32> to vector<16xf32>
    %129 = vector.shape_cast %128 : vector<16xf32> to vector<16x1xf32>
    %cst_47 = arith.constant 6.000000e+00 : f32
    %130 = vector.broadcast %cst_47 : f32 to vector<16x1xf32>
    %131 = arith.divf %129, %130 : vector<16x1xf32>
    %132 = arith.mulf %126, %126 : vector<16x1xf32>
    %133 = arith.subf %131, %132 : vector<16x1xf32>
    %134 = vector.broadcast %126 : vector<16x1xf32> to vector<16x6xf32>
    %135 = arith.subf %120, %134 : vector<16x6xf32>
    %cst_48 = arith.constant 9.99999974E-6 : f32
    %136 = vector.broadcast %cst_48 : f32 to vector<16x1xf32>
    %137 = arith.addf %133, %136 : vector<16x1xf32>
    %138 = math.rsqrt %137 : vector<16x1xf32>
    %139 = vector.broadcast %138 : vector<16x1xf32> to vector<16x6xf32>
    %140 = arith.mulf %135, %139 : vector<16x6xf32>
    %141 = vector.broadcast %121 : vector<1x6xf32> to vector<16x6xf32>
    %142 = arith.mulf %140, %141 : vector<16x6xf32>
    %143 = vector.broadcast %122 : vector<1x6xf32> to vector<16x6xf32>
    %144 = arith.addf %142, %143 : vector<16x6xf32>
    %c0_49 = arith.constant 0 : index
    %c0_50 = arith.constant 0 : index
    %145 = vector.load %arg3[%c0_49, %c0_50] : memref<16x6xf32, #tpu.memory_space<vmem>>, vector<16x6xf32>
    tpu.vector_store %arg3[%c0_49, %c0_50], %144 {strides = array<i32>} : memref<16x6xf32, #tpu.memory_space<vmem>>, vector<16x6xf32>,
    return
  }
}

</mosaic_0001>

<llo_original>
// kernel: attention_module_encode.1
$region0: #{attention_module_encode.1}
  #allocation0 [shape = 'u32[]', space=smem, size = 0x4, offset = 0x4, fixed_abs, tag = 'smem constant byte address 0x4 - core index']
  #allocation1 [shape = 'u32[144,128]{1,0:T(1,128)}', space=vmem, size = 0x12000, scoped, tag = 'internal scratch']
  %s0 = inlined_call_operand.vmem [shape: f32[16,6], index: 0, kind: input, shape index: {}]
  %s1 = inlined_call_operand.vmem [shape: f32[7,6,6], index: 1, kind: input, shape index: {}]
  %s2 = inlined_call_operand.vmem [shape: f32[12,6], index: 2, kind: input, shape index: {}]
  %s3 = inlined_call_operand.vmem [shape: f32[16,6], index: 3, kind: output, shape index: {}]
  %s4 = sld [smem:[#allocation0]]
  $region22: #{attention_module_encode.1} parent=0
    _
  %s6 = ssub.s32 1, %s4
  %s7 = scalar_select 0, %s6, %s4
  // Predicated region
  $region2: #{attention_module_encode.1} parent=0 // pred_check
    _
  $region3: #{attention_module_encode.1} parent=0 // pred_check_branch
    %9 = sbr.rel (0) target = $region5
  $region4: #{attention_module_encode.1} parent=0 // pred_region
    _
  $region5: #{attention_module_encode.1} parent=0 // pred_fallthru
    _
  // Predicated region
  $region6: #{attention_module_encode.1} parent=0 // pred_check
    _
  $region7: #{attention_module_encode.1} parent=0 // pred_check_branch
    %11 = sbr.rel (0) target = $region9
  $region8: #{attention_module_encode.1} parent=0 // pred_region
    _
  $region9: #{attention_module_encode.1} parent=0 // pred_fallthru
    _
  // Predicated region
  $region10: #{attention_module_encode.1} parent=0 // pred_check
    _
  $region11: #{attention_module_encode.1} parent=0 // pred_check_branch
    %13 = sbr.rel (0) target = $region13
  $region12: #{attention_module_encode.1} parent=0 // pred_region
    _
  $region13: #{attention_module_encode.1} parent=0 // pred_fallthru
    _
  %v14 = vld [vmem:[%s0] sm:$0xff]
  %v15 = vld [vmem:[%s0 + $0x8] sm:$0xff]
  %v16 = vld [vmem:[%s2] sm:$0xff]
  %v17 = vld [vmem:[%s2 + $0x8] sm:$0xf]
  %v18 = vlaneseq
  %v19 = vshrl.u32 %v18, 7
  %v20 = vadd.s32 %v19, 8
  %v21 = vadd.s32 %v19, 16
  %v22 = vadd.s32 %v19, 24
  %v23 = vlaneseq
  %v24 = vand.u32 %v23, 127
  %v25 = vxor.u32 %v19, %v24
  %v26 = vxor.u32 %v20, %v24
  %v27 = vxor.u32 %v21, %v24
  %v28 = vxor.u32 %v22, %v24
  %v29 = vand.u32 %v25, 1
  %v30 = vand.u32 %v26, 1
  %v31 = vand.u32 %v27, 1
  %v32 = vand.u32 %v28, 1
  %vm33 = vcmp.eq.s32.totalorder %v29, 0
  %vm34 = vcmp.eq.s32.totalorder %v30, 0
  %vm35 = vcmp.eq.s32.totalorder %v31, 0
  %vm36 = vcmp.eq.s32.totalorder %v32, 0
  %v37 = vsel %vm33, 0.0, -1e+30
  %v38 = vsel %vm34, 0.0, -1e+30
  %v39 = vsel %vm35, 0.0, -1e+30
  %v40 = vsel %vm36, 0.0, -1e+30
  %v41 = vld [vmem:[%s1] sm:$0x3f]
  %v42 = vlaneseq
  %v43 = vshrl.u32 %v42, 7
  %v44 = vsub.s32 0, %v43
  %v45 = vrot.slane %v16, %v44
  %vm46 = vcmask 48128
  %v48 = vsel %vm46, %v14, 0
  %v51 = vsel %vm46, %v15, 0
  %vm53 = vcmask 1045504
  %v55 = vsel %vm53, %v41, 0
  %57 = vmatprep.subr.mxu0 0.0
  %58 = vmatpush1.msra.mxu0 %v55
  %59 = vmatprep.subr.mxu0 0.0
  %60 = vmatpush1.msra.mxu0 0.0
  %61 = vmatprep.subr.mxu0 0.0
  %62 = vmatpush1.msra.mxu0 0.0
  %63 = vmatprep.subr.mxu0 0.0
  %64 = vmatpush1.msra.mxu0 0.0
  %65 = vmatprep.subr.mxu0 0.0
  %66 = vmatpush1.msra.mxu0 0.0
  %67 = vmatprep.subr.mxu0 0.0
  %68 = vmatpush1.msra.mxu0 0.0
  %69 = vmatprep.subr.mxu0 0.0
  %70 = vmatpush1.msra.mxu0 0.0
  %71 = vmatprep.subr.mxu0 0.0
  %72 = vmatpush1.msra.mxu0 0.0
  %73 = vmatprep.subr.mxu0 0.0
  %74 = vmatpush1.msra.mxu0 0.0
  %75 = vmatprep.subr.mxu0 0.0
  %76 = vmatpush1.msra.mxu0 0.0
  %77 = vmatprep.subr.mxu0 0.0
  %78 = vmatpush1.msra.mxu0 0.0
  %79 = vmatprep.subr.mxu0 0.0
  %80 = vmatpush1.msra.mxu0 0.0
  %81 = vmatprep.subr.mxu0 0.0
  %82 = vmatpush1.msra.mxu0 0.0
  %83 = vmatprep.subr.mxu0 0.0
  %84 = vmatpush1.msra.mxu0 0.0
  %85 = vmatprep.subr.mxu0 0.0
  %86 = vmatpush1.msra.mxu0 0.0
  %87 = vmatprep.subr.mxu0 0.0
  %88 = vmatpush1.msra.mxu0 0.0
  %89 = vmatprep.subr.mxu0 0.0
  %90 = vmatpush1.msra.mxu0 0.0
  %91 = vmatprep.subr.mxu0 0.0
  %92 = vmatpush1.msra.mxu0 0.0
  %93 = vmatprep.subr.mxu0 0.0
  %94 = vmatpush1.msra.mxu0 0.0
  %95 = vmatprep.subr.mxu0 0.0
  %96 = vmatpush1.msra.mxu0 0.0
  %97 = vmatprep.subr.mxu0 0.0
  %98 = vmatpush1.msra.mxu0 0.0
  %99 = vmatprep.subr.mxu0 0.0
  %100 = vmatpush1.msra.mxu0 0.0
  %101 = vmatprep.subr.mxu0 0.0
  %102 = vmatpush1.msra.mxu0 0.0
  %103 = vmatprep.subr.mxu0 0.0
  %104 = vmatpush1.msra.mxu0 0.0
  %105 = vmatprep.subr.mxu0 0.0
  %106 = vmatpush1.msra.mxu0 0.0
  %107 = vmatprep.subr.mxu0 0.0
  %108 = vmatpush1.msra.mxu0 0.0
  %109 = vmatprep.subr.mxu0 0.0
  %110 = vmatpush1.msra.mxu0 0.0
  %111 = vmatprep.subr.mxu0 0.0
  %112 = vmatpush1.msra.mxu0 0.0
  %113 = vmatprep.subr.mxu0 0.0
  %114 = vmatpush1.msra.mxu0 0.0
  %115 = vmatprep.subr.mxu0 0.0
  %116 = vmatpush1.msra.mxu0 0.0
  %117 = vmatprep.subr.mxu0 0.0
  %118 = vmatpush1.msra.mxu0 0.0
  %119 = vmatprep.subr.mxu0 0.0
  %120 = vmatpush1.msra.mxu0 0.0
  %121 = vmatprep.mubr.f32.mxu0 0.0
  %122 = vmatmul.mubr.f32.gmra.mrb[0].mxu0 %v48
  %v123 = vpop.f32.mrb[0].mxu0
  %v124 = vadd.f32 %v45, %v123
  %v125 = vpop.f32.mrb[0].mxu0
  %126 = vmatprep.mubr.f32.mxu0 0.0
  %127 = vmatmul.mubr.f32.gmra.mrb[0].mxu0 %v51
  %v128 = vpop.f32.mrb[0].mxu0
  %v129 = vadd.f32 %v45, %v128
  %v130 = vpop.f32.mrb[0].mxu0
  %131 = vdwg.mxu0
  %s132 = scalar_lea.vmem %s1, 8
  %v133 = vld [vmem:[%s132] sm:$0x3f]
  %v134 = vlaneseq
  %v135 = vshrl.u32 %v134, 7
  %v136 = vsub.s32 1, %v135
  %v137 = vrot.slane %v16, %v136
  %v139 = vsel %vm53, %v133, 0
  %141 = vmatprep.subr.mxu0 0.0
  %142 = vmatpush1.msra.mxu0 %v139
  %143 = vmatprep.subr.mxu0 0.0
  %144 = vmatpush1.msra.mxu0 0.0
  %145 = vmatprep.subr.mxu0 0.0
  %146 = vmatpush1.msra.mxu0 0.0
  %147 = vmatprep.subr.mxu0 0.0
  %148 = vmatpush1.msra.mxu0 0.0
  %149 = vmatprep.subr.mxu0 0.0
  %150 = vmatpush1.msra.mxu0 0.0
  %151 = vmatprep.subr.mxu0 0.0
  %152 = vmatpush1.msra.mxu0 0.0
  %153 = vmatprep.subr.mxu0 0.0
  %154 = vmatpush1.msra.mxu0 0.0
  %155 = vmatprep.subr.mxu0 0.0
  %156 = vmatpush1.msra.mxu0 0.0
  %157 = vmatprep.subr.mxu0 0.0
  %158 = vmatpush1.msra.mxu0 0.0
  %159 = vmatprep.subr.mxu0 0.0
  %160 = vmatpush1.msra.mxu0 0.0
  %161 = vmatprep.subr.mxu0 0.0
  %162 = vmatpush1.msra.mxu0 0.0
  %163 = vmatprep.subr.mxu0 0.0
  %164 = vmatpush1.msra.mxu0 0.0
  %165 = vmatprep.subr.mxu0 0.0
  %166 = vmatpush1.msra.mxu0 0.0
  %167 = vmatprep.subr.mxu0 0.0
  %168 = vmatpush1.msra.mxu0 0.0
  %169 = vmatprep.subr.mxu0 0.0
  %170 = vmatpush1.msra.mxu0 0.0
  %171 = vmatprep.subr.mxu0 0.0
  %172 = vmatpush1.msra.mxu0 0.0
  %173 = vmatprep.subr.mxu0 0.0
  %174 = vmatpush1.msra.mxu0 0.0
  %175 = vmatprep.subr.mxu0 0.0
  %176 = vmatpush1.msra.mxu0 0.0
  %177 = vmatprep.subr.mxu0 0.0
  %178 = vmatpush1.msra.mxu0 0.0
  %179 = vmatprep.subr.mxu0 0.0
  %180 = vmatpush1.msra.mxu0 0.0
  %181 = vmatprep.subr.mxu0 0.0
  %182 = vmatpush1.msra.mxu0 0.0
  %183 = vmatprep.subr.mxu0 0.0
  %184 = vmatpush1.msra.mxu0 0.0
  %185 = vmatprep.subr.mxu0 0.0
  %186 = vmatpush1.msra.mxu0 0.0
  %187 = vmatprep.subr.mxu0 0.0
  %188 = vmatpush1.msra.mxu0 0.0
  %189 = vmatprep.subr.mxu0 0.0
  %190 = vmatpush1.msra.mxu0 0.0
  %191 = vmatprep.subr.mxu0 0.0
  %192 = vmatpush1.msra.mxu0 0.0
  %193 = vmatprep.subr.mxu0 0.0
  %194 = vmatpush1.msra.mxu0 0.0
  %195 = vmatprep.subr.mxu0 0.0
  %196 = vmatpush1.msra.mxu0 0.0
  %197 = vmatprep.subr.mxu0 0.0
  %198 = vmatpush1.msra.mxu0 0.0
  %199 = vmatprep.subr.mxu0 0.0
  %200 = vmatpush1.msra.mxu0 0.0
  %201 = vmatprep.subr.mxu0 0.0
  %202 = vmatpush1.msra.mxu0 0.0
  %203 = vmatprep.subr.mxu0 0.0
  %204 = vmatpush1.msra.mxu0 0.0
  %205 = vmatprep.mubr.f32.mxu0 0.0
  %206 = vmatmul.mubr.f32.gmra.mrb[0].mxu0 %v48
  %v207 = vpop.f32.mrb[0].mxu0
  %v208 = vadd.f32 %v137, %v207
  %v209 = vpop.f32.mrb[0].mxu0
  %210 = vmatprep.mubr.f32.mxu0 0.0
  %211 = vmatmul.mubr.f32.gmra.mrb[0].mxu0 %v51
  %v212 = vpop.f32.mrb[0].mxu0
  %v213 = vadd.f32 %v137, %v212
  %v214 = vpop.f32.mrb[0].mxu0
  %215 = vdwg.mxu0
  %s216 = scalar_lea.vmem %s1, 16
  %v217 = vld [vmem:[%s216] sm:$0x3f]
  %v218 = vlaneseq
  %v219 = vshrl.u32 %v218, 7
  %v220 = vsub.s32 2, %v219
  %v221 = vrot.slane %v16, %v220
  %v223 = vsel %vm53, %v217, 0
  %225 = vmatprep.subr.mxu0 0.0
  %226 = vmatpush1.msra.mxu0 %v223
  %227 = vmatprep.subr.mxu0 0.0
  %228 = vmatpush1.msra.mxu0 0.0
  %229 = vmatprep.subr.mxu0 0.0
  %230 = vmatpush1.msra.mxu0 0.0
  %231 = vmatprep.subr.mxu0 0.0
  %232 = vmatpush1.msra.mxu0 0.0
  %233 = vmatprep.subr.mxu0 0.0
  %234 = vmatpush1.msra.mxu0 0.0
  %235 = vmatprep.subr.mxu0 0.0
  %236 = vmatpush1.msra.mxu0 0.0
  %237 = vmatprep.subr.mxu0 0.0
  %238 = vmatpush1.msra.mxu0 0.0
  %239 = vmatprep.subr.mxu0 0.0
  %240 = vmatpush1.msra.mxu0 0.0
  %241 = vmatprep.subr.mxu0 0.0
  %242 = vmatpush1.msra.mxu0 0.0
  %243 = vmatprep.subr.mxu0 0.0
  %244 = vmatpush1.msra.mxu0 0.0
  %245 = vmatprep.subr.mxu0 0.0
  %246 = vmatpush1.msra.mxu0 0.0
  %247 = vmatprep.subr.mxu0 0.0
  %248 = vmatpush1.msra.mxu0 0.0
  %249 = vmatprep.subr.mxu0 0.0
  %250 = vmatpush1.msra.mxu0 0.0
  %251 = vmatprep.subr.mxu0 0.0
  %252 = vmatpush1.msra.mxu0 0.0
  %253 = vmatprep.subr.mxu0 0.0
  %254 = vmatpush1.msra.mxu0 0.0
  %255 = vmatprep.subr.mxu0 0.0
  %256 = vmatpush1.msra.mxu0 0.0
  %257 = vmatprep.subr.mxu0 0.0
  %258 = vmatpush1.msra.mxu0 0.0
  %259 = vmatprep.subr.mxu0 0.0
  %260 = vmatpush1.msra.mxu0 0.0
  %261 = vmatprep.subr.mxu0 0.0
  %262 = vmatpush1.msra.mxu0 0.0
  %263 = vmatprep.subr.mxu0 0.0
  %264 = vmatpush1.msra.mxu0 0.0
  %265 = vmatprep.subr.mxu0 0.0
  %266 = vmatpush1.msra.mxu0 0.0
  %267 = vmatprep.subr.mxu0 0.0
  %268 = vmatpush1.msra.mxu0 0.0
  %269 = vmatprep.subr.mxu0 0.0
  %270 = vmatpush1.msra.mxu0 0.0
  %271 = vmatprep.subr.mxu0 0.0
  %272 = vmatpush1.msra.mxu0 0.0
  %273 = vmatprep.subr.mxu0 0.0
  %274 = vmatpush1.msra.mxu0 0.0
  %275 = vmatprep.subr.mxu0 0.0
  %276 = vmatpush1.msra.mxu0 0.0
  %277 = vmatprep.subr.mxu0 0.0
  %278 = vmatpush1.msra.mxu0 0.0
  %279 = vmatprep.subr.mxu0 0.0
  %280 = vmatpush1.msra.mxu0 0.0
  %281 = vmatprep.subr.mxu0 0.0
  %282 = vmatpush1.msra.mxu0 0.0
  %283 = vmatprep.subr.mxu0 0.0
  %284 = vmatpush1.msra.mxu0 0.0
  %285 = vmatprep.subr.mxu0 0.0
  %286 = vmatpush1.msra.mxu0 0.0
  %287 = vmatprep.subr.mxu0 0.0
  %288 = vmatpush1.msra.mxu0 0.0
  %289 = vmatprep.mubr.f32.mxu0 0.0
  %290 = vmatmul.mubr.f32.gmra.mrb[0].mxu0 %v48
  %v291 = vpop.f32.mrb[0].mxu0
  %v292 = vadd.f32 %v221, %v291
  %v293 = vpop.f32.mrb[0].mxu0
  %294 = vmatprep.mubr.f32.mxu0 0.0
  %295 = vmatmul.mubr.f32.gmra.mrb[0].mxu0 %v51
  %v296 = vpop.f32.mrb[0].mxu0
  %v297 = vadd.f32 %v221, %v296
  %v298 = vpop.f32.mrb[0].mxu0
  %299 = vdwg.mxu0
  %s300 = scalar_lea.vmem %s1, 24
  %v301 = vld [vmem:[%s300] sm:$0x3f]
  %v302 = vlaneseq
  %v303 = vshrl.u32 %v302, 7
  %v304 = vsub.s32 3, %v303
  %v305 = vrot.slane %v16, %v304
  %v307 = vsel %vm53, %v301, 0
  %309 = vmatprep.subr.mxu0 0.0
  %310 = vmatpush1.msra.mxu0 %v307
  %311 = vmatprep.subr.mxu0 0.0
  %312 = vmatpush1.msra.mxu0 0.0
  %313 = vmatprep.subr.mxu0 0.0
  %314 = vmatpush1.msra.mxu0 0.0
  %315 = vmatprep.subr.mxu0 0.0
  %316 = vmatpush1.msra.mxu0 0.0
  %317 = vmatprep.subr.mxu0 0.0
  %318 = vmatpush1.msra.mxu0 0.0
  %319 = vmatprep.subr.mxu0 0.0
  %320 = vmatpush1.msra.mxu0 0.0
  %321 = vmatprep.subr.mxu0 0.0
  %322 = vmatpush1.msra.mxu0 0.0
  %323 = vmatprep.subr.mxu0 0.0
  %324 = vmatpush1.msra.mxu0 0.0
  %325 = vmatprep.subr.mxu0 0.0
  %326 = vmatpush1.msra.mxu0 0.0
  %327 = vmatprep.subr.mxu0 0.0
  %328 = vmatpush1.msra.mxu0 0.0
  %329 = vmatprep.subr.mxu0 0.0
  %330 = vmatpush1.msra.mxu0 0.0
  %331 = vmatprep.subr.mxu0 0.0
  %332 = vmatpush1.msra.mxu0 0.0
  %333 = vmatprep.subr.mxu0 0.0
  %334 = vmatpush1.msra.mxu0 0.0
  %335 = vmatprep.subr.mxu0 0.0
  %336 = vmatpush1.msra.mxu0 0.0
  %337 = vmatprep.subr.mxu0 0.0
  %338 = vmatpush1.msra.mxu0 0.0
  %339 = vmatprep.subr.mxu0 0.0
  %340 = vmatpush1.msra.mxu0 0.0
  %341 = vmatprep.subr.mxu0 0.0
  %342 = vmatpush1.msra.mxu0 0.0
  %343 = vmatprep.subr.mxu0 0.0
  %344 = vmatpush1.msra.mxu0 0.0
  %345 = vmatprep.subr.mxu0 0.0
  %346 = vmatpush1.msra.mxu0 0.0
  %347 = vmatprep.subr.mxu0 0.0
  %348 = vmatpush1.msra.mxu0 0.0
  %349 = vmatprep.subr.mxu0 0.0
  %350 = vmatpush1.msra.mxu0 0.0
  %351 = vmatprep.subr.mxu0 0.0
  %352 = vmatpush1.msra.mxu0 0.0
  %353 = vmatprep.subr.mxu0 0.0
  %354 = vmatpush1.msra.mxu0 0.0
  %355 = vmatprep.subr.mxu0 0.0
  %356 = vmatpush1.msra.mxu0 0.0
  %357 = vmatprep.subr.mxu0 0.0
  %358 = vmatpush1.msra.mxu0 0.0
  %359 = vmatprep.subr.mxu0 0.0
  %360 = vmatpush1.msra.mxu0 0.0
  %361 = vmatprep.subr.mxu0 0.0
  %362 = vmatpush1.msra.mxu0 0.0
  %363 = vmatprep.subr.mxu0 0.0
  %364 = vmatpush1.msra.mxu0 0.0
  %365 = vmatprep.subr.mxu0 0.0
  %366 = vmatpush1.msra.mxu0 0.0
  %367 = vmatprep.subr.mxu0 0.0
  %368 = vmatpush1.msra.mxu0 0.0
  %369 = vmatprep.subr.mxu0 0.0
  %370 = vmatpush1.msra.mxu0 0.0
  %371 = vmatprep.subr.mxu0 0.0
  %372 = vmatpush1.msra.mxu0 0.0
  %373 = vmatprep.mubr.f32.mxu0 0.0
  %374 = vmatmul.mubr.f32.gmra.mrb[0].mxu0 %v48
  %v375 = vpop.f32.mrb[0].mxu0
  %v376 = vadd.f32 %v305, %v375
  %v377 = vpop.f32.mrb[0].mxu0
  %378 = vmatprep.mubr.f32.mxu0 0.0
  %379 = vmatmul.mubr.f32.gmra.mrb[0].mxu0 %v51
  %v380 = vpop.f32.mrb[0].mxu0
  %v381 = vadd.f32 %v305, %v380
  %v382 = vpop.f32.mrb[0].mxu0
  %383 = vdwg.mxu0
  %s384 = scalar_lea.vmem %s1, 32
  %v385 = vld [vmem:[%s384] sm:$0x3f]
  %v386 = vlaneseq
  %v387 = vshrl.u32 %v386, 7
  %v388 = vsub.s32 4, %v387
  %v389 = vrot.slane %v16, %v388
  %v391 = vsel %vm53, %v385, 0
  %393 = vmatprep.subr.mxu0 0.0
  %394 = vmatpush1.msra.mxu0 %v391
  %395 = vmatprep.subr.mxu0 0.0
  %396 = vmatpush1.msra.mxu0 0.0
  %397 = vmatprep.subr.mxu0 0.0
  %398 = vmatpush1.msra.mxu0 0.0
  %399 = vmatprep.subr.mxu0 0.0
  %400 = vmatpush1.msra.mxu0 0.0
  %401 = vmatprep.subr.mxu0 0.0
  %402 = vmatpush1.msra.mxu0 0.0
  %403 = vmatprep.subr.mxu0 0.0
  %404 = vmatpush1.msra.mxu0 0.0
  %405 = vmatprep.subr.mxu0 0.0
  %406 = vmatpush1.msra.mxu0 0.0
  %407 = vmatprep.subr.mxu0 0.0
  %408 = vmatpush1.msra.mxu0 0.0
  %409 = vmatprep.subr.mxu0 0.0
  %410 = vmatpush1.msra.mxu0 0.0
  %411 = vmatprep.subr.mxu0 0.0
  %412 = vmatpush1.msra.mxu0 0.0
  %413 = vmatprep.subr.mxu0 0.0
  %414 = vmatpush1.msra.mxu0 0.0
  %415 = vmatprep.subr.mxu0 0.0
  %416 = vmatpush1.msra.mxu0 0.0
  %417 = vmatprep.subr.mxu0 0.0
  %418 = vmatpush1.msra.mxu0 0.0
  %419 = vmatprep.subr.mxu0 0.0
  %420 = vmatpush1.msra.mxu0 0.0
  %421 = vmatprep.subr.mxu0 0.0
  %422 = vmatpush1.msra.mxu0 0.0
  %423 = vmatprep.subr.mxu0 0.0
  %424 = vmatpush1.msra.mxu0 0.0
  %425 = vmatprep.subr.mxu0 0.0
  %426 = vmatpush1.msra.mxu0 0.0
  %427 = vmatprep.subr.mxu0 0.0
  %428 = vmatpush1.msra.mxu0 0.0
  %429 = vmatprep.subr.mxu0 0.0
  %430 = vmatpush1.msra.mxu0 0.0
  %431 = vmatprep.subr.mxu0 0.0
  %432 = vmatpush1.msra.mxu0 0.0
  %433 = vmatprep.subr.mxu0 0.0
  %434 = vmatpush1.msra.mxu0 0.0
  %435 = vmatprep.subr.mxu0 0.0
  %436 = vmatpush1.msra.mxu0 0.0
  %437 = vmatprep.subr.mxu0 0.0
  %438 = vmatpush1.msra.mxu0 0.0
  %439 = vmatprep.subr.mxu0 0.0
  %440 = vmatpush1.msra.mxu0 0.0
  %441 = vmatprep.subr.mxu0 0.0
  %442 = vmatpush1.msra.mxu0 0.0
  %443 = vmatprep.subr.mxu0 0.0
  %444 = vmatpush1.msra.mxu0 0.0
  %445 = vmatprep.subr.mxu0 0.0
  %446 = vmatpush1.msra.mxu0 0.0
  %447 = vmatprep.subr.mxu0 0.0
  %448 = vmatpush1.msra.mxu0 0.0
  %449 = vmatprep.subr.mxu0 0.0
  %450 = vmatpush1.msra.mxu0 0.0
  %451 = vmatprep.subr.mxu0 0.0
  %452 = vmatpush1.msra.mxu0 0.0
  %453 = vmatprep.subr.mxu0 0.0
  %454 = vmatpush1.msra.mxu0 0.0
  %455 = vmatprep.subr.mxu0 0.0
  %456 = vmatpush1.msra.mxu0 0.0
  %457 = vmatprep.mubr.f32.mxu0 0.0
  %458 = vmatmul.mubr.f32.gmra.mrb[0].mxu0 %v48
  %v459 = vpop.f32.mrb[0].mxu0
  %v460 = vadd.f32 %v389, %v459
  %v461 = vpop.f32.mrb[0].mxu0
  %462 = vmatprep.mubr.f32.mxu0 0.0
  %463 = vmatmul.mubr.f32.gmra.mrb[0].mxu0 %v51
  %v464 = vpop.f32.mrb[0].mxu0
  %v465 = vadd.f32 %v389, %v464
  %v466 = vpop.f32.mrb[0].mxu0
  %467 = vdwg.mxu0
  %v469 = vsel %vm46, %v124, 0
  %v472 = vsel %vm46, %v129, 0
  %v475 = vsel %vm46, %v208, 0
  %v478 = vsel %vm46, %v213, 0
  %v481 = vsel %vm46, %v292, 0
  %v484 = vsel %vm46, %v297, 0
  %486 = vmatprep.subr.mxu0 0.0
  %487 = vmatpush1.xpose.msra.mxu0 %v481
  %488 = vmatprep.subr.mxu0 0.0
  %489 = vmatpush1.xpose.msra.mxu0 %v484
  %490 = vmatprep.subr.mxu0 0.0
  %491 = vmatpush1.xpose.msra.mxu0 0.0
  %492 = vmatprep.subr.mxu0 0.0
  %493 = vmatpush1.xpose.msra.mxu0 0.0
  %494 = vmatprep.subr.mxu0 0.0
  %495 = vmatpush1.xpose.msra.mxu0 0.0
  %496 = vmatprep.subr.mxu0 0.0
  %497 = vmatpush1.xpose.msra.mxu0 0.0
  %498 = vmatprep.subr.mxu0 0.0
  %499 = vmatpush1.xpose.msra.mxu0 0.0
  %500 = vmatprep.subr.mxu0 0.0
  %501 = vmatpush1.xpose.msra.mxu0 0.0
  %502 = vmatprep.subr.mxu0 0.0
  %503 = vmatpush1.xpose.msra.mxu0 0.0
  %504 = vmatprep.subr.mxu0 0.0
  %505 = vmatpush1.xpose.msra.mxu0 0.0
  %506 = vmatprep.subr.mxu0 0.0
  %507 = vmatpush1.xpose.msra.mxu0 0.0
  %508 = vmatprep.subr.mxu0 0.0
  %509 = vmatpush1.xpose.msra.mxu0 0.0
  %510 = vmatprep.subr.mxu0 0.0
  %511 = vmatpush1.xpose.msra.mxu0 0.0
  %512 = vmatprep.subr.mxu0 0.0
  %513 = vmatpush1.xpose.msra.mxu0 0.0
  %514 = vmatprep.subr.mxu0 0.0
  %515 = vmatpush1.xpose.msra.mxu0 0.0
  %516 = vmatprep.subr.mxu0 0.0
  %517 = vmatpush1.xpose.msra.mxu0 0.0
  %518 = vmatprep.subr.mxu0 0.0
  %519 = vmatpush1.xpose.msra.mxu0 0.0
  %520 = vmatprep.subr.mxu0 0.0
  %521 = vmatpush1.xpose.msra.mxu0 0.0
  %522 = vmatprep.subr.mxu0 0.0
  %523 = vmatpush1.xpose.msra.mxu0 0.0
  %524 = vmatprep.subr.mxu0 0.0
  %525 = vmatpush1.xpose.msra.mxu0 0.0
  %526 = vmatprep.subr.mxu0 0.0
  %527 = vmatpush1.xpose.msra.mxu0 0.0
  %528 = vmatprep.subr.mxu0 0.0
  %529 = vmatpush1.xpose.msra.mxu0 0.0
  %530 = vmatprep.subr.mxu0 0.0
  %531 = vmatpush1.xpose.msra.mxu0 0.0
  %532 = vmatprep.subr.mxu0 0.0
  %533 = vmatpush1.xpose.msra.mxu0 0.0
  %534 = vmatprep.subr.mxu0 0.0
  %535 = vmatpush1.xpose.msra.mxu0 0.0
  %536 = vmatprep.subr.mxu0 0.0
  %537 = vmatpush1.xpose.msra.mxu0 0.0
  %538 = vmatprep.subr.mxu0 0.0
  %539 = vmatpush1.xpose.msra.mxu0 0.0
  %540 = vmatprep.subr.mxu0 0.0
  %541 = vmatpush1.xpose.msra.mxu0 0.0
  %542 = vmatprep.subr.mxu0 0.0
  %543 = vmatpush1.xpose.msra.mxu0 0.0
  %544 = vmatprep.subr.mxu0 0.0
  %545 = vmatpush1.xpose.msra.mxu0 0.0
  %546 = vmatprep.subr.mxu0 0.0
  %547 = vmatpush1.xpose.msra.mxu0 0.0
  %548 = vmatprep.subr.mxu0 0.0
  %549 = vmatpush1.xpose.msra.mxu0 0.0
  %550 = vmatprep.mubr.f32.mxu0 0.0
  %551 = vmatmul.mubr.f32.gmra.mrb[0].mxu0 %v469
  %v552 = vpop.f32.mrb[0].mxu0
  %v553 = vadd.f32 %v37, %v552
  %v554 = vpop.f32.mrb[0].mxu0
  %555 = vmatprep.mubr.f32.mxu0 0.0
  %556 = vmatmul.mubr.f32.gmra.mrb[0].mxu0 %v472
  %v557 = vpop.f32.mrb[0].mxu0
  %v558 = vadd.f32 %v38, %v557
  %v559 = vpop.f32.mrb[0].mxu0
  %560 = vmatprep.mubr.f32.mxu0 0.0
  %561 = vmatmul.mubr.f32.gmra.mrb[0].mxu0 %v475
  %v562 = vpop.f32.mrb[0].mxu0
  %v563 = vadd.f32 %v39, %v562
  %v564 = vpop.f32.mrb[0].mxu0
  %565 = vmatprep.mubr.f32.mxu0 0.0
  %566 = vmatmul.mubr.f32.gmra.mrb[0].mxu0 %v478
  %v567 = vpop.f32.mrb[0].mxu0
  %v568 = vadd.f32 %v40, %v567
  %v569 = vpop.f32.mrb[0].mxu0
  %570 = vdwg.mxu0
  %vm571 = vcmask 130048
  %v572 = vsel %vm571, %v553, -inf
  %573 = vmax.xlane.f32.xlu0 %v572
  %v574 = vpop.xlane.xlu0 %573
  %v575 = vsel %vm571, %v558, -inf
  %576 = vmax.xlane.f32.xlu0 %v575
  %v577 = vpop.xlane.xlu0 %576
  %v578 = vsel %vm571, %v563, -inf
  %579 = vmax.xlane.f32.xlu0 %v578
  %v580 = vpop.xlane.xlu0 %579
  %v581 = vsel %vm571, %v568, -inf
  %582 = vmax.xlane.f32.xlu0 %v581
  %v583 = vpop.xlane.xlu0 %582
  %v584 = vsub.f32 %v553, %v574
  %v585 = vsub.f32 %v558, %v577
  %v586 = vsub.f32 %v563, %v580
  %v587 = vsub.f32 %v568, %v583
  %v588 = vmul.f32 %v584, 1.442695
  %v589 = vpow.pop %v588
  %v590 = vmul.f32 %v585, 1.442695
  %v591 = vpow.pop %v590
  %v592 = vmul.f32 %v586, 1.442695
  %v593 = vpow.pop %v592
  %v594 = vmul.f32 %v587, 1.442695
  %v595 = vpow.pop %v594
  %v596 = vsel %vm571, %v589, 0.0
  %597 = vadd.xlane.f32.xlu0 %v596
  %v598 = vpop.xlane.xlu0 %597
  %v599 = vsel %vm571, %v591, 0.0
  %600 = vadd.xlane.f32.xlu0 %v599
  %v601 = vpop.xlane.xlu0 %600
  %v602 = vsel %vm571, %v593, 0.0
  %603 = vadd.xlane.f32.xlu0 %v602
  %v604 = vpop.xlane.xlu0 %603
  %v605 = vsel %vm571, %v595, 0.0
  %606 = vadd.xlane.f32.xlu0 %v605
  %v607 = vpop.xlane.xlu0 %606
  %v608 = vrcp.pop %v598
  %v609 = vrcp.pop %v601
  %v610 = vrcp.pop %v604
  %v611 = vrcp.pop %v607
  %v612 = vmul.f32 %v589, %v608
  %v613 = vmul.f32 %v591, %v609
  %v614 = vmul.f32 %v593, %v610
  %v615 = vmul.f32 %v595, %v611
  %v617 = vsel %vm571, %v614, 0
  %v620 = vsel %vm571, %v615, 0
  %622 = vmatprep.subr.mxu0 0.0
  %623 = vmatpush1.msra.mxu0 %v460
  %624 = vmatprep.subr.mxu0 0.0
  %625 = vmatpush1.msra.mxu0 %v465
  %626 = vmatprep.subr.mxu0 0.0
  %627 = vmatpush1.msra.mxu0 0.0
  %628 = vmatprep.subr.mxu0 0.0
  %629 = vmatpush1.msra.mxu0 0.0
  %630 = vmatprep.subr.mxu0 0.0
  %631 = vmatpush1.msra.mxu0 0.0
  %632 = vmatprep.subr.mxu0 0.0
  %633 = vmatpush1.msra.mxu0 0.0
  %634 = vmatprep.subr.mxu0 0.0
  %635 = vmatpush1.msra.mxu0 0.0
  %636 = vmatprep.subr.mxu0 0.0
  %637 = vmatpush1.msra.mxu0 0.0
  %638 = vmatprep.subr.mxu0 0.0
  %639 = vmatpush1.msra.mxu0 0.0
  %640 = vmatprep.subr.mxu0 0.0
  %641 = vmatpush1.msra.mxu0 0.0
  %642 = vmatprep.subr.mxu0 0.0
  %643 = vmatpush1.msra.mxu0 0.0
  %644 = vmatprep.subr.mxu0 0.0
  %645 = vmatpush1.msra.mxu0 0.0
  %646 = vmatprep.subr.mxu0 0.0
  %647 = vmatpush1.msra.mxu0 0.0
  %648 = vmatprep.subr.mxu0 0.0
  %649 = vmatpush1.msra.mxu0 0.0
  %650 = vmatprep.subr.mxu0 0.0
  %651 = vmatpush1.msra.mxu0 0.0
  %652 = vmatprep.subr.mxu0 0.0
  %653 = vmatpush1.msra.mxu0 0.0
  %654 = vmatprep.subr.mxu0 0.0
  %655 = vmatpush1.msra.mxu0 0.0
  %656 = vmatprep.subr.mxu0 0.0
  %657 = vmatpush1.msra.mxu0 0.0
  %658 = vmatprep.subr.mxu0 0.0
  %659 = vmatpush1.msra.mxu0 0.0
  %660 = vmatprep.subr.mxu0 0.0
  %661 = vmatpush1.msra.mxu0 0.0
  %662 = vmatprep.subr.mxu0 0.0
  %663 = vmatpush1.msra.mxu0 0.0
  %664 = vmatprep.subr.mxu0 0.0
  %665 = vmatpush1.msra.mxu0 0.0
  %666 = vmatprep.subr.mxu0 0.0
  %667 = vmatpush1.msra.mxu0 0.0
  %668 = vmatprep.subr.mxu0 0.0
  %669 = vmatpush1.msra.mxu0 0.0
  %670 = vmatprep.subr.mxu0 0.0
  %671 = vmatpush1.msra.mxu0 0.0
  %672 = vmatprep.subr.mxu0 0.0
  %673 = vmatpush1.msra.mxu0 0.0
  %674 = vmatprep.subr.mxu0 0.0
  %675 = vmatpush1.msra.mxu0 0.0
  %676 = vmatprep.subr.mxu0 0.0
  %677 = vmatpush1.msra.mxu0 0.0
  %678 = vmatprep.subr.mxu0 0.0
  %679 = vmatpush1.msra.mxu0 0.0
  %680 = vmatprep.subr.mxu0 0.0
  %681 = vmatpush1.msra.mxu0 0.0
  %682 = vmatprep.subr.mxu0 0.0
  %683 = vmatpush1.msra.mxu0 0.0
  %684 = vmatprep.subr.mxu0 0.0
  %685 = vmatpush1.msra.mxu0 0.0
  %686 = vmatprep.mubr.f32.mxu0 0.0
  %687 = vmatmul.mubr.f32.gmra.mrb[0].mxu0 %v617
  %v688 = vpop.f32.mrb[0].mxu0
  %v689 = vadd.f32 0.0, %v688
  %v690 = vpop.f32.mrb[0].mxu0
  %691 = vmatprep.mubr.f32.mxu0 0.0
  %692 = vmatmul.mubr.f32.gmra.mrb[0].mxu0 %v620
  %v693 = vpop.f32.mrb[0].mxu0
  %v694 = vadd.f32 0.0, %v693
  %v695 = vpop.f32.mrb[0].mxu0
  %696 = vdwg.mxu0
  %v698 = vsel %vm571, %v612, 0
  %v701 = vsel %vm571, %v613, 0
  %703 = vmatprep.subr.mxu0 0.0
  %704 = vmatpush1.msra.mxu0 %v376
  %705 = vmatprep.subr.mxu0 0.0
  %706 = vmatpush1.msra.mxu0 %v381
  %707 = vmatprep.subr.mxu0 0.0
  %708 = vmatpush1.msra.mxu0 0.0
  %709 = vmatprep.subr.mxu0 0.0
  %710 = vmatpush1.msra.mxu0 0.0
  %711 = vmatprep.subr.mxu0 0.0
  %712 = vmatpush1.msra.mxu0 0.0
  %713 = vmatprep.subr.mxu0 0.0
  %714 = vmatpush1.msra.mxu0 0.0
  %715 = vmatprep.subr.mxu0 0.0
  %716 = vmatpush1.msra.mxu0 0.0
  %717 = vmatprep.subr.mxu0 0.0
  %718 = vmatpush1.msra.mxu0 0.0
  %719 = vmatprep.subr.mxu0 0.0
  %720 = vmatpush1.msra.mxu0 0.0
  %721 = vmatprep.subr.mxu0 0.0
  %722 = vmatpush1.msra.mxu0 0.0
  %723 = vmatprep.subr.mxu0 0.0
  %724 = vmatpush1.msra.mxu0 0.0
  %725 = vmatprep.subr.mxu0 0.0
  %726 = vmatpush1.msra.mxu0 0.0
  %727 = vmatprep.subr.mxu0 0.0
  %728 = vmatpush1.msra.mxu0 0.0
  %729 = vmatprep.subr.mxu0 0.0
  %730 = vmatpush1.msra.mxu0 0.0
  %731 = vmatprep.subr.mxu0 0.0
  %732 = vmatpush1.msra.mxu0 0.0
  %733 = vmatprep.subr.mxu0 0.0
  %734 = vmatpush1.msra.mxu0 0.0
  %735 = vmatprep.subr.mxu0 0.0
  %736 = vmatpush1.msra.mxu0 0.0
  %737 = vmatprep.subr.mxu0 0.0
  %738 = vmatpush1.msra.mxu0 0.0
  %739 = vmatprep.subr.mxu0 0.0
  %740 = vmatpush1.msra.mxu0 0.0
  %741 = vmatprep.subr.mxu0 0.0
  %742 = vmatpush1.msra.mxu0 0.0
  %743 = vmatprep.subr.mxu0 0.0
  %744 = vmatpush1.msra.mxu0 0.0
  %745 = vmatprep.subr.mxu0 0.0
  %746 = vmatpush1.msra.mxu0 0.0
  %747 = vmatprep.subr.mxu0 0.0
  %748 = vmatpush1.msra.mxu0 0.0
  %749 = vmatprep.subr.mxu0 0.0
  %750 = vmatpush1.msra.mxu0 0.0
  %751 = vmatprep.subr.mxu0 0.0
  %752 = vmatpush1.msra.mxu0 0.0
  %753 = vmatprep.subr.mxu0 0.0
  %754 = vmatpush1.msra.mxu0 0.0
  %755 = vmatprep.subr.mxu0 0.0
  %756 = vmatpush1.msra.mxu0 0.0
  %757 = vmatprep.subr.mxu0 0.0
  %758 = vmatpush1.msra.mxu0 0.0
  %759 = vmatprep.subr.mxu0 0.0
  %760 = vmatpush1.msra.mxu0 0.0
  %761 = vmatprep.subr.mxu0 0.0
  %762 = vmatpush1.msra.mxu0 0.0
  %763 = vmatprep.subr.mxu0 0.0
  %764 = vmatpush1.msra.mxu0 0.0
  %765 = vmatprep.subr.mxu0 0.0
  %766 = vmatpush1.msra.mxu0 0.0
  %767 = vmatprep.mubr.f32.mxu0 0.0
  %768 = vmatmul.mubr.f32.gmra.mrb[0].mxu0 %v698
  %v769 = vpop.f32.mrb[0].mxu0
  %v770 = vadd.f32 %v689, %v769
  %v771 = vpop.f32.mrb[0].mxu0
  %772 = vmatprep.mubr.f32.mxu0 0.0
  %773 = vmatmul.mubr.f32.gmra.mrb[0].mxu0 %v701
  %v774 = vpop.f32.mrb[0].mxu0
  %v775 = vadd.f32 %v694, %v774
  %v776 = vpop.f32.mrb[0].mxu0
  %777 = vdwg.mxu0
  %v778 = vlaneseq
  %v779 = vshrl.u32 %v778, 7
  %v780 = vsub.s32 5, %v779
  %v781 = vrot.slane %v16, %v780
  %v782 = vadd.f32 %v770, %v781
  %v783 = vadd.f32 %v775, %v781
  %v784 = vadd.f32 %v782, %v14
  %v785 = vadd.f32 %v783, %v15
  %vm786 = vcmp.ge.f32.partialorder %v784, 0.0
  %vm787 = vcmp.ge.f32.partialorder %v785, 0.0
  %v788 = vmul.f32 %v784, 0.2
  %v789 = vmul.f32 %v785, 0.2
  %v790 = vsel %vm786, %v784, %v788
  %v791 = vsel %vm787, %v785, %v789
  %v792 = vsel %vm46, %v790, 0.0
  %793 = vadd.xlane.f32.xlu0 %v792
  %v794 = vpop.xlane.xlu0 %793
  %v795 = vsel %vm46, %v791, 0.0
  %796 = vadd.xlane.f32.xlu0 %v795
  %v797 = vpop.xlane.xlu0 %796
  %v798 = vrcp.pop 6.0
  %v799 = vmul.f32 %v794, %v798
  %v800 = vmul.f32 %v797, %v798
  %v801 = vmul.f32 %v790, %v790
  %v802 = vmul.f32 %v791, %v791
  %v803 = vsel %vm46, %v801, 0.0
  %804 = vadd.xlane.f32.xlu0 %v803
  %v805 = vpop.xlane.xlu0 %804
  %v806 = vsel %vm46, %v802, 0.0
  %807 = vadd.xlane.f32.xlu0 %v806
  %v808 = vpop.xlane.xlu0 %807
  %v809 = vmul.f32 %v805, %v798
  %v810 = vmul.f32 %v808, %v798
  %v811 = vmul.f32 %v799, %v799
  %v812 = vmul.f32 %v800, %v800
  %v813 = vsub.f32 %v809, %v811
  %v814 = vsub.f32 %v810, %v812
  %v815 = vsub.f32 %v790, %v799
  %v816 = vsub.f32 %v791, %v800
  %v817 = vadd.f32 %v813, 1e-05
  %v818 = vadd.f32 %v814, 1e-05
  %v819 = vrsqrt.pop %v817
  %v820 = vrsqrt.pop %v818
  %v821 = vmul.f32 %v815, %v819
  %v822 = vmul.f32 %v816, %v820
  %v823 = vlaneseq
  %v824 = vshrl.u32 %v823, 7
  %v825 = vsub.s32 0, %v824
  %v826 = vrot.slane %v17, %v825
  %v827 = vmul.f32 %v821, %v826
  %v828 = vmul.f32 %v822, %v826
  %v829 = vlaneseq
  %v830 = vshrl.u32 %v829, 7
  %v831 = vsub.s32 1, %v830
  %v832 = vrot.slane %v17, %v831
  %v833 = vadd.f32 %v827, %v832
  %v834 = vadd.f32 %v828, %v832
  %s835 = scalar_lea.vmem %s1, 40
  %v836 = vld [vmem:[%s835] sm:$0x3f]
  %v837 = vlaneseq
  %v838 = vshrl.u32 %v837, 7
  %v839 = vsub.s32 6, %v838
  %v840 = vrot.slane %v16, %v839
  %v842 = vsel %vm46, %v833, 0
  %v845 = vsel %vm46, %v834, 0
  %v848 = vsel %vm53, %v836, 0
  %850 = vmatprep.subr.mxu0 0.0
  %851 = vmatpush1.msra.mxu0 %v848
  %852 = vmatprep.subr.mxu0 0.0
  %853 = vmatpush1.msra.mxu0 0.0
  %854 = vmatprep.subr.mxu0 0.0
  %855 = vmatpush1.msra.mxu0 0.0
  %856 = vmatprep.subr.mxu0 0.0
  %857 = vmatpush1.msra.mxu0 0.0
  %858 = vmatprep.subr.mxu0 0.0
  %859 = vmatpush1.msra.mxu0 0.0
  %860 = vmatprep.subr.mxu0 0.0
  %861 = vmatpush1.msra.mxu0 0.0
  %862 = vmatprep.subr.mxu0 0.0
  %863 = vmatpush1.msra.mxu0 0.0
  %864 = vmatprep.subr.mxu0 0.0
  %865 = vmatpush1.msra.mxu0 0.0
  %866 = vmatprep.subr.mxu0 0.0
  %867 = vmatpush1.msra.mxu0 0.0
  %868 = vmatprep.subr.mxu0 0.0
  %869 = vmatpush1.msra.mxu0 0.0
  %870 = vmatprep.subr.mxu0 0.0
  %871 = vmatpush1.msra.mxu0 0.0
  %872 = vmatprep.subr.mxu0 0.0
  %873 = vmatpush1.msra.mxu0 0.0
  %874 = vmatprep.subr.mxu0 0.0
  %875 = vmatpush1.msra.mxu0 0.0
  %876 = vmatprep.subr.mxu0 0.0
  %877 = vmatpush1.msra.mxu0 0.0
  %878 = vmatprep.subr.mxu0 0.0
  %879 = vmatpush1.msra.mxu0 0.0
  %880 = vmatprep.subr.mxu0 0.0
  %881 = vmatpush1.msra.mxu0 0.0
  %882 = vmatprep.subr.mxu0 0.0
  %883 = vmatpush1.msra.mxu0 0.0
  %884 = vmatprep.subr.mxu0 0.0
  %885 = vmatpush1.msra.mxu0 0.0
  %886 = vmatprep.subr.mxu0 0.0
  %887 = vmatpush1.msra.mxu0 0.0
  %888 = vmatprep.subr.mxu0 0.0
  %889 = vmatpush1.msra.mxu0 0.0
  %890 = vmatprep.subr.mxu0 0.0
  %891 = vmatpush1.msra.mxu0 0.0
  %892 = vmatprep.subr.mxu0 0.0
  %893 = vmatpush1.msra.mxu0 0.0
  %894 = vmatprep.subr.mxu0 0.0
  %895 = vmatpush1.msra.mxu0 0.0
  %896 = vmatprep.subr.mxu0 0.0
  %897 = vmatpush1.msra.mxu0 0.0
  %898 = vmatprep.subr.mxu0 0.0
  %899 = vmatpush1.msra.mxu0 0.0
  %900 = vmatprep.subr.mxu0 0.0
  %901 = vmatpush1.msra.mxu0 0.0
  %902 = vmatprep.subr.mxu0 0.0
  %903 = vmatpush1.msra.mxu0 0.0
  %904 = vmatprep.subr.mxu0 0.0
  %905 = vmatpush1.msra.mxu0 0.0
  %906 = vmatprep.subr.mxu0 0.0
  %907 = vmatpush1.msra.mxu0 0.0
  %908 = vmatprep.subr.mxu0 0.0
  %909 = vmatpush1.msra.mxu0 0.0
  %910 = vmatprep.subr.mxu0 0.0
  %911 = vmatpush1.msra.mxu0 0.0
  %912 = vmatprep.subr.mxu0 0.0
  %913 = vmatpush1.msra.mxu0 0.0
  %914 = vmatprep.mubr.f32.mxu0 0.0
  %915 = vmatmul.mubr.f32.gmra.mrb[0].mxu0 %v842
  %v916 = vpop.f32.mrb[0].mxu0
  %v917 = vadd.f32 %v840, %v916
  %v918 = vpop.f32.mrb[0].mxu0
  %919 = vmatprep.mubr.f32.mxu0 0.0
  %920 = vmatmul.mubr.f32.gmra.mrb[0].mxu0 %v845
  %v921 = vpop.f32.mrb[0].mxu0
  %v922 = vadd.f32 %v840, %v921
  %v923 = vpop.f32.mrb[0].mxu0
  %924 = vdwg.mxu0
  %vm925 = vcmp.ge.f32.partialorder %v917, 0.0
  %vm926 = vcmp.ge.f32.partialorder %v922, 0.0
  %v927 = vmul.f32 %v917, 0.2
  %v928 = vmul.f32 %v922, 0.2
  %v929 = vsel %vm925, %v917, %v927
  %v930 = vsel %vm926, %v922, %v928
  %s931 = scalar_lea.vmem %s1, 48
  %v932 = vld [vmem:[%s931] sm:$0x3f]
  %v933 = vlaneseq
  %v934 = vshrl.u32 %v933, 7
  %v935 = vsub.s32 7, %v934
  %v936 = vrot.slane %v16, %v935
  %v938 = vsel %vm46, %v929, 0
  %v941 = vsel %vm46, %v930, 0
  %v944 = vsel %vm53, %v932, 0
  %946 = vmatprep.subr.mxu0 0.0
  %947 = vmatpush1.msra.mxu0 %v944
  %948 = vmatprep.subr.mxu0 0.0
  %949 = vmatpush1.msra.mxu0 0.0
  %950 = vmatprep.subr.mxu0 0.0
  %951 = vmatpush1.msra.mxu0 0.0
  %952 = vmatprep.subr.mxu0 0.0
  %953 = vmatpush1.msra.mxu0 0.0
  %954 = vmatprep.subr.mxu0 0.0
  %955 = vmatpush1.msra.mxu0 0.0
  %956 = vmatprep.subr.mxu0 0.0
  %957 = vmatpush1.msra.mxu0 0.0
  %958 = vmatprep.subr.mxu0 0.0
  %959 = vmatpush1.msra.mxu0 0.0
  %960 = vmatprep.subr.mxu0 0.0
  %961 = vmatpush1.msra.mxu0 0.0
  %962 = vmatprep.subr.mxu0 0.0
  %963 = vmatpush1.msra.mxu0 0.0
  %964 = vmatprep.subr.mxu0 0.0
  %965 = vmatpush1.msra.mxu0 0.0
  %966 = vmatprep.subr.mxu0 0.0
  %967 = vmatpush1.msra.mxu0 0.0
  %968 = vmatprep.subr.mxu0 0.0
  %969 = vmatpush1.msra.mxu0 0.0
  %970 = vmatprep.subr.mxu0 0.0
  %971 = vmatpush1.msra.mxu0 0.0
  %972 = vmatprep.subr.mxu0 0.0
  %973 = vmatpush1.msra.mxu0 0.0
  %974 = vmatprep.subr.mxu0 0.0
  %975 = vmatpush1.msra.mxu0 0.0
  %976 = vmatprep.subr.mxu0 0.0
  %977 = vmatpush1.msra.mxu0 0.0
  %978 = vmatprep.subr.mxu0 0.0
  %979 = vmatpush1.msra.mxu0 0.0
  %980 = vmatprep.subr.mxu0 0.0
  %981 = vmatpush1.msra.mxu0 0.0
  %982 = vmatprep.subr.mxu0 0.0
  %983 = vmatpush1.msra.mxu0 0.0
  %984 = vmatprep.subr.mxu0 0.0
  %985 = vmatpush1.msra.mxu0 0.0
  %986 = vmatprep.subr.mxu0 0.0
  %987 = vmatpush1.msra.mxu0 0.0
  %988 = vmatprep.subr.mxu0 0.0
  %989 = vmatpush1.msra.mxu0 0.0
  %990 = vmatprep.subr.mxu0 0.0
  %991 = vmatpush1.msra.mxu0 0.0
  %992 = vmatprep.subr.mxu0 0.0
  %993 = vmatpush1.msra.mxu0 0.0
  %994 = vmatprep.subr.mxu0 0.0
  %995 = vmatpush1.msra.mxu0 0.0
  %996 = vmatprep.subr.mxu0 0.0
  %997 = vmatpush1.msra.mxu0 0.0
  %998 = vmatprep.subr.mxu0 0.0
  %999 = vmatpush1.msra.mxu0 0.0
  %1000 = vmatprep.subr.mxu0 0.0
  %1001 = vmatpush1.msra.mxu0 0.0
  %1002 = vmatprep.subr.mxu0 0.0
  %1003 = vmatpush1.msra.mxu0 0.0
  %1004 = vmatprep.subr.mxu0 0.0
  %1005 = vmatpush1.msra.mxu0 0.0
  %1006 = vmatprep.subr.mxu0 0.0
  %1007 = vmatpush1.msra.mxu0 0.0
  %1008 = vmatprep.subr.mxu0 0.0
  %1009 = vmatpush1.msra.mxu0 0.0
  %1010 = vmatprep.mubr.f32.mxu0 0.0
  %1011 = vmatmul.mubr.f32.gmra.mrb[0].mxu0 %v938
  %v1012 = vpop.f32.mrb[0].mxu0
  %v1013 = vadd.f32 %v936, %v1012
  %v1014 = vpop.f32.mrb[0].mxu0
  %1015 = vmatprep.mubr.f32.mxu0 0.0
  %1016 = vmatmul.mubr.f32.gmra.mrb[0].mxu0 %v941
  %v1017 = vpop.f32.mrb[0].mxu0
  %v1018 = vadd.f32 %v936, %v1017
  %v1019 = vpop.f32.mrb[0].mxu0
  %1020 = vdwg.mxu0
  %vm1021 = vcmp.ge.f32.partialorder %v1013, 0.0
  %vm1022 = vcmp.ge.f32.partialorder %v1018, 0.0
  %v1023 = vmul.f32 %v1013, 0.2
  %v1024 = vmul.f32 %v1018, 0.2
  %v1025 = vsel %vm1021, %v1013, %v1023
  %v1026 = vsel %vm1022, %v1018, %v1024
  %v1027 = vadd.f32 %v1025, %v833
  %v1028 = vadd.f32 %v1026, %v834
  %vm1029 = vcmp.ge.f32.partialorder %v1027, 0.0
  %vm1030 = vcmp.ge.f32.partialorder %v1028, 0.0
  %v1031 = vmul.f32 %v1027, 0.2
  %v1032 = vmul.f32 %v1028, 0.2
  %v1033 = vsel %vm1029, %v1027, %v1031
  %v1034 = vsel %vm1030, %v1028, %v1032
  %v1035 = vsel %vm46, %v1033, 0.0
  %1036 = vadd.xlane.f32.xlu0 %v1035
  %v1037 = vpop.xlane.xlu0 %1036
  %v1038 = vsel %vm46, %v1034, 0.0
  %1039 = vadd.xlane.f32.xlu0 %v1038
  %v1040 = vpop.xlane.xlu0 %1039
  %v1041 = vmul.f32 %v1037, %v798
  %v1042 = vmul.f32 %v1040, %v798
  %v1043 = vmul.f32 %v1033, %v1033
  %v1044 = vmul.f32 %v1034, %v1034
  %v1045 = vsel %vm46, %v1043, 0.0
  %1046 = vadd.xlane.f32.xlu0 %v1045
  %v1047 = vpop.xlane.xlu0 %1046
  %v1048 = vsel %vm46, %v1044, 0.0
  %1049 = vadd.xlane.f32.xlu0 %v1048
  %v1050 = vpop.xlane.xlu0 %1049
  %v1051 = vmul.f32 %v1047, %v798
  %v1052 = vmul.f32 %v1050, %v798
  %v1053 = vmul.f32 %v1041, %v1041
  %v1054 = vmul.f32 %v1042, %v1042
  %v1055 = vsub.f32 %v1051, %v1053
  %v1056 = vsub.f32 %v1052, %v1054
  %v1057 = vsub.f32 %v1033, %v1041
  %v1058 = vsub.f32 %v1034, %v1042
  %v1059 = vadd.f32 %v1055, 1e-05
  %v1060 = vadd.f32 %v1056, 1e-05
  %v1061 = vrsqrt.pop %v1059
  %v1062 = vrsqrt.pop %v1060
  %v1063 = vmul.f32 %v1057, %v1061
  %v1064 = vmul.f32 %v1058, %v1062
  %v1065 = vlaneseq
  %v1066 = vshrl.u32 %v1065, 7
  %v1067 = vsub.s32 2, %v1066
  %v1068 = vrot.slane %v17, %v1067
  %v1069 = vmul.f32 %v1063, %v1068
  %v1070 = vmul.f32 %v1064, %v1068
  %v1071 = vlaneseq
  %v1072 = vshrl.u32 %v1071, 7
  %v1073 = vsub.s32 3, %v1072
  %v1074 = vrot.slane %v17, %v1073
  %v1075 = vadd.f32 %v1069, %v1074
  %v1076 = vadd.f32 %v1070, %v1074
  %1077 = vst.msk [vmem:[%s3] sm:$0xff] %vm46, %v1075
  %1078 = vst.msk [vmem:[%s3 + $0x8] sm:$0xff] %vm46, %v1076
  // Predicated region
  $region14: #{attention_module_encode.1} parent=0 // pred_check
    _
  $region15: #{attention_module_encode.1} parent=0 // pred_check_branch
    %1080 = sbr.rel (0) target = $region17
  $region16: #{attention_module_encode.1} parent=0 // pred_region
    _
  $region17: #{attention_module_encode.1} parent=0 // pred_fallthru
    _
  // Predicated region
  $region18: #{attention_module_encode.1} parent=0 // pred_check
    _
  $region19: #{attention_module_encode.1} parent=0 // pred_check_branch
    %1082 = sbr.rel (0) target = $region21
  $region20: #{attention_module_encode.1} parent=0 // pred_region
    _
  $region21: #{attention_module_encode.1} parent=0 // pred_fallthru
    _

</llo_original>
